<compile_context>
chip_gen: v5e
topology: v5e:2x2
jax: 0.10.0
libtpu: 0.0.40
codegen_flags: <defaults>
</compile_context>

<pallas_src>
import jax
import jax.numpy as jnp
from jax.experimental import pallas as pl
from jax.experimental.pallas import tpu as pltpu

_LANE = 128
_TC_CAP_LANES = 8192            # cap tc at a few K lanes (keeps >=2-3 col steps)
_TR_CAP = 512                   # rows per tile cap (keeps the row axis shardable)
_MAX_TILE_ELEMS = 512 * 1024    # ~2 MiB f32 per tile buffer
_SMALL_INPUT_BYTES = 1 << 20    # below this, plain XLA beats the Pallas launch


def normalize_kernel(x_ref, scale_ref, bias_ref, o_ref):
    """x_ref: (tr, tc) tile of the flattened (rows, cols) frames.
    scale_ref / bias_ref: full-extent (rows, 1) f32 columns, resident in VMEM;
    the rows belonging to this tile are sliced out here.  One fused
    multiply-add on the VPU (no vector divide)."""
    tr = x_ref.shape[0]
    r0 = pl.multiple_of(pl.program_id(0) * tr, tr)
    s = scale_ref[pl.ds(r0, tr), :]
    b = bias_ref[pl.ds(r0, tr), :]
    x = x_ref[...].astype(jnp.float32)
    o_ref[...] = (x * s + b).astype(o_ref.dtype)


def _vmem_limit_bytes():
    """Generation-aware scoped-VMEM budget: half of physical VMEM, <= 64 MiB
    (v5e/v6e: 128 MiB -> 64 MiB limit, v7x: 64 MiB -> 32 MiB limit)."""
    cap = 128 * 1024 * 1024
    try:
        cap = int(getattr(pltpu.get_tpu_info(), "vmem_capacity_bytes", cap))
    except Exception:
        pass
    return int(min(cap // 2, 64 * 1024 * 1024))


def _row_fold(rows, cols, sublane):
    """Smallest k that folds (rows, cols) -> (rows*k, cols//k) so the row count
    becomes a sublane multiple (dense, unmasked sublane stores); prefers a k
    that keeps cols//k a multiple of 128 (lane-dense).  Returns 1 when rows is
    already aligned or no usable k exists."""
    if rows % sublane == 0:
        return 1
    fallback = 1
    for k in range(2, sublane + 1):
        if cols % k or (rows * k) % sublane:
            continue
        if (cols // k) % _LANE == 0:
            return k
        if fallback == 1:
            fallback = k
    return fallback


def _pick_div_tile(dim, align, cap):
    """Largest multiple of `align` that is <= cap and (if possible) divides
    `dim` evenly (no partial boundary block).  Hard floor of `align`; never
    falls back to the full dim (returns `dim` only when dim <= align, where a
    full-extent block is always layout-legal)."""
    if dim <= align:
        return dim
    cap = max(align, (min(cap, dim) // align) * align)
    t = cap
    while t > align and dim % t:
        t -= align
    return t if dim % t == 0 else cap


def normalize(frames, mean, std, *, force_pallas=False):
    if not jnp.issubdtype(frames.dtype, jnp.floating):
        frames = frames.astype(jnp.float32)
    b, c, h, w = frames.shape
    itemsize = jnp.dtype(frames.dtype).itemsize

    # Fold (mean, std) into a fused multiply-add: (x - m)/s == x*(1/s) + (-m/s).
    scale = (1.0 / std).astype(jnp.float32)
    bias = (-mean / std).astype(jnp.float32)

    # Fast path: tiny inputs are dominated by per-step + launch overhead.
    if not force_pallas and frames.size * itemsize < _SMALL_INPUT_BYTES:
        out = (frames.astype(jnp.float32) * scale.reshape(1, c, 1, 1)
               + bias.reshape(1, c, 1, 1))
        return out.astype(frames.dtype)

    rows, cols = b * c, h * w
    sublane = max(8, 32 // itemsize)  # 8 for f32, 16 for bf16, 32 for int8

    # Fold part of H*W into the rows when B*C is not a sublane multiple.
    k = _row_fold(rows, cols, sublane)
    rows, cols = rows * k, cols // k

    # Row r of the flattened (rows, cols) view belongs to channel (r // k) % c.
    scale_rows = jnp.broadcast_to(scale[None, :, None], (b, c, k)).reshape(rows, 1)
    bias_rows = jnp.broadcast_to(bias[None, :, None], (b, c, k)).reshape(rows, 1)

    x2d = frames.reshape(rows, cols)  # free reshape: NCHW is contiguous

    vmem_limit = _vmem_limit_bytes()
    # 4 pipeline buffers (in x2 + out x2) must fit with headroom.
    max_tile_elems = min(_MAX_TILE_ELEMS, vmem_limit // (8 * itemsize))

    # ---- tr first (>= sublane, divides rows), then tc from remaining budget.
    if rows % sublane == 0:
        tr = _pick_div_tile(rows, sublane, min(rows, _TR_CAP))
    else:
        # Rare (fold failed): full-extent row axis is always layout-legal and,
        # because tc is derived afterwards, the tile still honours the budget.
        tr = rows
    tc_budget = max(_LANE, (max_tile_elems // max(tr, 1) // _LANE) * _LANE)
    tc = _pick_div_tile(cols, _LANE, min(_TC_CAP_LANES, tc_budget))

    # Guarantee >= 2 grid steps so v7x can shard the parallel axes over 2 TCs
    # and the software pipeline has something to overlap.
    if pl.cdiv(rows, tr) * pl.cdiv(cols, tc) < 2:
        if tc > _LANE:
            tc = _pick_div_tile(cols, _LANE, max(_LANE, tc // 2))
        elif rows % sublane == 0 and tr > sublane:
            tr = _pick_div_tile(rows, sublane, max(sublane, tr // 2))

    grid = (pl.cdiv(rows, tr), pl.cdiv(cols, tc))

    out2d = pl.pallas_call(
        normalize_kernel,
        out_shape=jax.ShapeDtypeStruct((rows, cols), frames.dtype),
        grid=grid,
        in_specs=[
            pl.BlockSpec((tr, tc), lambda i, j: (i, j)),    # frames tile
            pl.BlockSpec((rows, 1), lambda i, j: (0, 0)),   # resident scale
            pl.BlockSpec((rows, 1), lambda i, j: (0, 0)),   # resident bias
        ],
        out_specs=pl.BlockSpec((tr, tc), lambda i, j: (i, j)),
        compiler_params=pltpu.CompilerParams(
            # Both axes are independent -> shardable across v7x's 2 TensorCores.
            dimension_semantics=("parallel", "parallel"),
            vmem_limit_bytes=vmem_limit,
        ),
    )(x2d, scale_rows, bias_rows)

    return out2d.reshape(b, c, h, w)


# TODO(synk): the rest of track_match_comb.forward (ResNet/VGG encoders,
# decoder, NLM affinity, diff_crop/center2bbox, contrastive head, dropout2d
# with numpy RNG) depends on pretrained torch submodules / host RNG and has no
# clean standalone Pallas equivalent; only the `normalize` submodule is
# implemented here.


if __name__ == "__main__":
    key = jax.random.PRNGKey(0)
    k1, k2, k3 = jax.random.split(key, 3)

    # Module parameters (normalize(mean=[...], std=[...]) in __init__).
    mean = jnp.array([0.485, 0.456, 0.406], dtype=jnp.float32)
    std = jnp.array([0.229, 0.224, 0.225], dtype=jnp.float32)

    def ref_norm(x):
        return (x - mean.reshape(1, 3, 1, 1)) / std.reshape(1, 3, 1, 1)

    # 1) Tiny NCHW input (b=2, c=3, 16x16): default path -> plain XLA fast path.
    x_small = jax.random.uniform(k1, (2, 3, 16, 16), dtype=jnp.float32)
    out = jax.block_until_ready(normalize(x_small, mean, std))
    assert out.shape == x_small.shape and out.dtype == x_small.dtype
    assert jnp.allclose(out, ref_norm(x_small), rtol=1e-5, atol=1e-5)

    # 2) Same tiny input forced through the Pallas kernel (row-folded path).
    out = jax.block_until_ready(normalize(x_small, mean, std, force_pallas=True))
    assert jnp.allclose(out, ref_norm(x_small), rtol=1e-5, atol=1e-5)

    # 3) Frame-sized input: default path picks Pallas (lane-dense multi-step grid).
    x_frame = jax.random.uniform(k2, (2, 3, 224, 224), dtype=jnp.float32)
    out = jax.block_until_ready(normalize(x_frame, mean, std))
    assert out.shape == x_frame.shape and out.dtype == x_frame.dtype
    assert jnp.allclose(out, ref_norm(x_frame), rtol=1e-5, atol=1e-5)

    # 4) Awkward spatial size (H*W not a multiple of 128): partial boundary blocks.
    x_odd = jax.random.uniform(k3, (2, 3, 30, 30), dtype=jnp.float32)
    out = jax.block_until_ready(normalize(x_odd, mean, std, force_pallas=True))
    assert out.shape == x_odd.shape and out.dtype == x_odd.dtype
    assert jnp.allclose(out, ref_norm(x_odd), rtol=1e-5, atol=1e-5)

    print("KERNEL_OK")
</pallas_src>

<mosaic_0001>
module attributes {stable_mosaic.version = 11 : i64} {
  func.func @normalize_kernel(%arg0: i32, %arg1: i32, %arg2: memref<8x64xf32, #tpu.memory_space<vmem>>, %arg3: memref<24x1xf32, #tpu.memory_space<vmem>>, %arg4: memref<24x1xf32, #tpu.memory_space<vmem>>, %arg5: memref<8x64xf32, #tpu.memory_space<vmem>>) attributes {dimension_semantics = [#tpu.dimension_semantics<parallel>, #tpu.dimension_semantics<parallel>], iteration_bounds = array<i64: 3, 1>, scalar_prefetch = 0 : i64, scratch_operands = 0 : i64, tpu.core_type = #tpu.core_type<tc>, window_params = [{transform_indices = @transform_0, window_bounds = array<i64: 8, 64>}, {pipeline_mode = #tpu.pipeline_mode<synchronous>, transform_indices = @transform_1, window_bounds = array<i64: 24, 1>}, {pipeline_mode = #tpu.pipeline_mode<synchronous>, transform_indices = @transform_2, window_bounds = array<i64: 24, 1>}, {transform_indices = @transform_3, window_bounds = array<i64: 8, 64>}]} {
    %c8_i32 = arith.constant 8 : i32
    %0 = arith.muli %arg0, %c8_i32 : i32
    %1 = tpu.assume_multiple %0, 8 : i32
    %2 = arith.index_cast %1 : i32 to index
    %c0 = arith.constant 0 : index
    %3 = vector.load %arg3[%2, %c0] : memref<24x1xf32, #tpu.memory_space<vmem>>, vector<8x1xf32>
    %4 = arith.index_cast %1 : i32 to index
    %c0_0 = arith.constant 0 : index
    %5 = vector.load %arg4[%4, %c0_0] : memref<24x1xf32, #tpu.memory_space<vmem>>, vector<8x1xf32>
    %c0_1 = arith.constant 0 : index
    %c0_2 = arith.constant 0 : index
    %6 = vector.load %arg2[%c0_1, %c0_2] : memref<8x64xf32, #tpu.memory_space<vmem>>, vector<8x64xf32>
    %7 = vector.broadcast %3 : vector<8x1xf32> to vector<8x64xf32>
    %8 = arith.mulf %6, %7 : vector<8x64xf32>
    %9 = vector.broadcast %5 : vector<8x1xf32> to vector<8x64xf32>
    %10 = arith.addf %8, %9 : vector<8x64xf32>
    %c0_3 = arith.constant 0 : index
    %c0_4 = arith.constant 0 : index
    %11 = vector.load %arg5[%c0_3, %c0_4] : memref<8x64xf32, #tpu.memory_space<vmem>>, vector<8x64xf32>
    tpu.vector_store %arg5[%c0_3, %c0_4], %10 {strides = array<i32>} : memref<8x64xf32, #tpu.memory_space<vmem>>, vector<8x64xf32>,
    return
  }
  func.func @transform_0(%arg0: i32, %arg1: i32) -> (i32, i32) {
    %c0_i32 = arith.constant 0 : i32
    return %arg0, %arg1 : i32, i32
  }
  func.func @transform_1(%arg0: i32, %arg1: i32) -> (i32, i32) {
    %c0_i32 = arith.constant 0 : i32
    %c0_i32_0 = arith.constant 0 : i32
    %c0_i32_1 = arith.constant 0 : i32
    return %c0_i32, %c0_i32_0 : i32, i32
  }
  func.func @transform_2(%arg0: i32, %arg1: i32) -> (i32, i32) {
    %c0_i32 = arith.constant 0 : i32
    %c0_i32_0 = arith.constant 0 : i32
    %c0_i32_1 = arith.constant 0 : i32
    return %c0_i32, %c0_i32_0 : i32, i32
  }
  func.func @transform_3(%arg0: i32, %arg1: i32) -> (i32, i32) {
    %c0_i32 = arith.constant 0 : i32
    return %arg0, %arg1 : i32, i32
  }
}

</mosaic_0001>

<llo_original>
// kernel: tpu_custom_call.1
$region0: #{tpu_custom_call.1}
  #allocation0 [shape = 'u32[]', space=smem, size = 0x4, offset = 0x4, fixed_abs, tag = 'smem constant byte address 0x4 - core index']
  #allocation1 [shape = 'u32[72,128]{1,0:T(1,128)}', space=vmem, size = 0x9000, scoped, tag = 'internal scratch']
  %s0 = inlined_call_operand.vmem [shape: f32[24,64], index: 0, kind: input, shape index: {}]
  %s1 = inlined_call_operand.vmem [shape: f32[24,1], index: 1, kind: input, shape index: {}]
  %s2 = inlined_call_operand.vmem [shape: f32[24,1], index: 2, kind: input, shape index: {}]
  %s3 = inlined_call_operand.hbm [shape: f32[24,64], index: 3, kind: output, shape index: {}]
  %s4 = sld [smem:[#allocation0]]
  $region45: #{tpu_custom_call.1} parent=0
    _
  %s6 = ssub.s32 1, %s4
  %s7 = scalar_select 0, %s6, %s4
  $region1: #{tpu_custom_call.1} parent=0
    #allocation2 [shape = 'u8[8192]{0}', space=vmem, size = 0x2000, scoped, tag = 'output window, operand 0']
    #allocation3 [shape = 's32[2]{0}', space=sflag, size = 0x8, scoped, tag = 'scoped memory for tpu_custom_call.1']
    %8 = vsyncpa [#allocation3], 0
    %s9 = scalar_lea.sflag [#allocation3], 1
    %10 = vsyncpa %s9, 0
    loop: start=0, step=1, limit=5
    $region2: #{tpu_custom_call.1} parent=1 // loop_pre_header
      _
    $region3: #{tpu_custom_call.1} parent=1 // loop_header
      %s12 = sphi 0, %s16
      %p13 = scmp.ge.s32.totalorder %s12, 5
      %s19 = sphi 0, %s31
      %s20 = sphi 0, %s27
      %s21 = sphi 0, %s19
      %s22 = sphi 0, %s20
      %s23 = sphi 0, %s21
      %s24 = sphi 0, %s22
      %s36 = sphi 0, %s38
      %s39 = sphi 0, %s36
      %s40 = sphi 0, %s39
      %s56 = sphi 0, %s40
      %s60 = sphi 0, %s60
      %s62 = sphi 0, %s60
      %s63 = sphi 0, %s62
      %s77 = sphi 0, %s63
      %s81 = sphi 0, %s81
      %s83 = sphi 0, %s81
      %s84 = sphi 0, %s83
      %s98 = sphi 0, %s84
      %s106 = sphi 0, %s108
      %s109 = sphi 0, %s106
      %s110 = sphi 0, %s109
      %s126 = sphi 0, %s110
    $region4: #{tpu_custom_call.1} parent=1 // loop_header_branch
      %15 = sbr.rel (%p13) target = $region8
    $region5: #{tpu_custom_call.1} parent=1 // loop_body
      %s17 = ssub.s32 %s12, 1
      %s18 = ssub.s32 %s12, 2
      %s25 = sadd.s32 1, %s20
      %p26 = scmp.ge.s32.totalorder %s25, 1
      %s27 = scalar_select %p26, 0, %s25
      %s28 = sadd.s32 1, %s19
      %s29 = scalar_select %p26, %s28, %s19
      %p30 = scmp.ge.s32.totalorder %s29, 3
      %s31 = scalar_select %p30, 0, %s29
      %s32 = ssub.s32 %s19, %s31
      %s33 = ssub.s32 %s20, %s27
      %s34 = sor.u32 %s32, %s33
      %p35 = scmp.eq.s32.totalorder %s34, 0
      %s37 = sadd.s32 %s36, 1
      %s38 = scalar_select %p35, %s36, %s37
      %p41 = pneg %p35
      %p42 = scmp.eq.s32.totalorder %s12, 2
      %p43 = por %p41, %p42
      %p44 = scmp.ne.s32.totalorder %s36, %s39
      %p45 = scmp.eq.s32.totalorder %s12, 0
      %p46 = por %p44, %p45
      %p47 = scmp.ne.s32.totalorder %s36, %s39
      %p48 = scmp.eq.s32.totalorder %s17, 2
      %p49 = por %p47, %p48
      %p50 = scmp.ne.s32.totalorder %s39, %s40
      %p51 = scmp.eq.s32.totalorder %s17, 0
      %p52 = por %p50, %p51
      %p53 = scmp.ne.s32.totalorder %s39, %s40
      %p54 = scmp.eq.s32.totalorder %s18, 2
      %p55 = por %p53, %p54
      %p57 = scmp.ne.s32.totalorder %s40, %s56
      %p58 = scmp.eq.s32.totalorder %s18, 0
      %p59 = por %p57, %p58
      %s61 = sadd.s32 %s60, 1
      %p64 = scmp.eq.s32.totalorder %s12, 2
      %p65 = scmp.ne.s32.totalorder %s60, %s62
      %p66 = scmp.eq.s32.totalorder %s12, 0
      %p67 = por %p65, %p66
      %p68 = scmp.ne.s32.totalorder %s60, %s62
      %p69 = scmp.eq.s32.totalorder %s17, 2
      %p70 = por %p68, %p69
      %p71 = scmp.ne.s32.totalorder %s62, %s63
      %p72 = scmp.eq.s32.totalorder %s17, 0
      %p73 = por %p71, %p72
      %p74 = scmp.ne.s32.totalorder %s62, %s63
      %p75 = scmp.eq.s32.totalorder %s18, 2
      %p76 = por %p74, %p75
      %p78 = scmp.ne.s32.totalorder %s63, %s77
      %p79 = scmp.eq.s32.totalorder %s18, 0
      %p80 = por %p78, %p79
      %s82 = sadd.s32 %s81, 1
      %p85 = scmp.eq.s32.totalorder %s12, 2
      %p86 = scmp.ne.s32.totalorder %s81, %s83
      %p87 = scmp.eq.s32.totalorder %s12, 0
      %p88 = por %p86, %p87
      %p89 = scmp.ne.s32.totalorder %s81, %s83
      %p90 = scmp.eq.s32.totalorder %s17, 2
      %p91 = por %p89, %p90
      %p92 = scmp.ne.s32.totalorder %s83, %s84
      %p93 = scmp.eq.s32.totalorder %s17, 0
      %p94 = por %p92, %p93
      %p95 = scmp.ne.s32.totalorder %s83, %s84
      %p96 = scmp.eq.s32.totalorder %s18, 2
      %p97 = por %p95, %p96
      %p99 = scmp.ne.s32.totalorder %s84, %s98
      %p100 = scmp.eq.s32.totalorder %s18, 0
      %p101 = por %p99, %p100
      %s102 = ssub.s32 %s19, %s31
      %s103 = ssub.s32 %s20, %s27
      %s104 = sor.u32 %s102, %s103
      %p105 = scmp.eq.s32.totalorder %s104, 0
      %s107 = sadd.s32 %s106, 1
      %s108 = scalar_select %p105, %s106, %s107
      %p111 = pneg %p105
      %p112 = scmp.eq.s32.totalorder %s12, 2
      %p113 = por %p111, %p112
      %p114 = scmp.ne.s32.totalorder %s106, %s109
      %p115 = scmp.eq.s32.totalorder %s12, 0
      %p116 = por %p114, %p115
      %p117 = scmp.ne.s32.totalorder %s106, %s109
      %p118 = scmp.eq.s32.totalorder %s17, 2
      %p119 = por %p117, %p118
      %p120 = scmp.ne.s32.totalorder %s109, %s110
      %p121 = scmp.eq.s32.totalorder %s17, 0
      %p122 = por %p120, %p121
      %p123 = scmp.ne.s32.totalorder %s109, %s110
      %p124 = scmp.eq.s32.totalorder %s18, 2
      %p125 = por %p123, %p124
      %p127 = scmp.ne.s32.totalorder %s110, %s126
      %p128 = scmp.eq.s32.totalorder %s18, 0
      %p129 = por %p127, %p128
      %p130 = scmp.le.s32.totalorder 1, %s12
      %p131 = scmp.lt.s32.totalorder %s12, 4
      %p132 = pnand %p130, %p131
      %p133 = pneg %p132
      // Predicated region
      $region9: #{tpu_custom_call.1} parent=5 // pred_check
        _
      $region10: #{tpu_custom_call.1} parent=5 // pred_check_branch
        %135 = sbr.rel (%p132) target = $region12
      $region11: #{tpu_custom_call.1} parent=5 // pred_region
        %s136 = ssub.s32 %s12, 1
        // Predicated region
        $region13: #{tpu_custom_call.1} parent=11 // pred_check
          %p137 = pneg %p73
        $region14: #{tpu_custom_call.1} parent=11 // pred_check_branch
          %139 = sbr.rel (%p137) target = $region16
        $region15: #{tpu_custom_call.1} parent=11 // pred_region
          _
        $region16: #{tpu_custom_call.1} parent=11 // pred_fallthru
          _
        // Predicated region
        $region17: #{tpu_custom_call.1} parent=11 // pred_check
          %p140 = pneg %p94
        $region18: #{tpu_custom_call.1} parent=11 // pred_check_branch
          %142 = sbr.rel (%p140) target = $region20
        $region19: #{tpu_custom_call.1} parent=11 // pred_region
          _
        $region20: #{tpu_custom_call.1} parent=11 // pred_fallthru
          _
      $region12: #{tpu_custom_call.1} parent=5 // pred_fallthru
        _
      %p143 = scmp.lt.s32.totalorder %s12, 3
      // Predicated region
      $region21: #{tpu_custom_call.1} parent=5 // pred_check
        %p144 = pneg %p143
      $region22: #{tpu_custom_call.1} parent=5 // pred_check_branch
        %146 = sbr.rel (%p144) target = $region24
      $region23: #{tpu_custom_call.1} parent=5 // pred_region
        // Predicated region
        $region25: #{tpu_custom_call.1} parent=23 // pred_check
          %p147 = pneg %p46
        $region26: #{tpu_custom_call.1} parent=23 // pred_check_branch
          %149 = sbr.rel (%p147) target = $region28
        $region27: #{tpu_custom_call.1} parent=23 // pred_region
          %p150 = scmp.lt.s32.totalorder %s19, 2
          %s151 = scalar_select %p150, %s19, 2
          %p152 = scmp.lt.s32.totalorder %s20, 0
          %s153 = scalar_select %p152, %s20, 0
          %s154 = sadd.s32 %s153, %s151
          %s155 = smul.addr %s154, 8
          %s156 = scalar_lea.vmem %s0, %s155
        $region28: #{tpu_custom_call.1} parent=23 // pred_fallthru
          _
      $region24: #{tpu_custom_call.1} parent=5 // pred_fallthru
        _
      %p157 = scmp.le.s32.totalorder 1, %s12
      %p158 = scmp.lt.s32.totalorder %s12, 4
      %p159 = pnand %p157, %p158
      %p160 = pneg %p159
      // Predicated region
      $region29: #{tpu_custom_call.1} parent=5 // pred_check
        _
      $region30: #{tpu_custom_call.1} parent=5 // pred_check_branch
        %162 = sbr.rel (%p159) target = $region32
      $region31: #{tpu_custom_call.1} parent=5 // pred_region
        %s163 = ssub.s32 %s12, 1
        %p164 = scmp.lt.s32.totalorder %s21, 2
        %s165 = scalar_select %p164, %s21, 2
        %p166 = scmp.lt.s32.totalorder %s22, 0
        %s167 = scalar_select %p166, %s22, 0
        %s168 = sadd.s32 %s167, %s165
        %s169 = smul.addr %s168, 8
        %s170 = scalar_lea.vmem %s0, %s169
        %p171 = pneg %p52
        %p172 = pneg %p49
        %p173 = pneg %p73
        %p174 = pneg %p70
        %p175 = pneg %p94
        %p176 = pneg %p91
        %p177 = pneg %p122
        %p178 = pneg %p119
        %s179 = sand.u32 %s109, 1
        %s180 = scalar_lea.sflag [#allocation3], %s179
        %s181 = sand.u32 %s109, 1
        %s182 = smul.addr %s181, 8
        %s183 = scalar_lea.vmem [#allocation2], %s182
        %p184 = scmp.lt.s32.totalorder %s21, 2
        %s185 = scalar_select %p184, %s21, 2
        %p186 = scmp.lt.s32.totalorder %s22, 0
        %s187 = scalar_select %p186, %s22, 0
        %s188 = sadd.s32 %s187, %s185
        %s189 = smul.addr %s188, 8
        %s190 = scalar_lea.vmem %s0, %s189
        %s191 = smul.u32 %s21, 8
        %s192 = scalar_lea.vmem %s1, %s191
        %v193 = vld [vmem:[%s192] sm:$0xff]
        %s194 = scalar_lea.vmem %s2, %s191
        %v195 = vld [vmem:[%s194] sm:$0xff]
        %v196 = vld [vmem:[%s190] sm:$0xff]
        %198 = vset.pattern.permute.xlu0 0
        %199 = vperm.xlu0 %198, %v193
        %v200 = vpop.permute.xlu0 %199
        %v202 = vmul.f32 %v196, %v200
        %204 = vset.pattern.permute.xlu0 0
        %205 = vperm.xlu0 %204, %v195
        %v206 = vpop.permute.xlu0 %205
        %v208 = vadd.f32 %v202, %v206
        %vm209 = vcmask 523264
        %210 = vst.msk [vmem:[%s183] sm:$0xff] %vm209, %v208
        %s211 = sand.u32 %s109, 1
        %s212 = scalar_lea.sflag [#allocation3], %s211
        %s213 = sand.u32 %s109, 1
        %s214 = smul.addr %s213, 8
        %s215 = scalar_lea.vmem [#allocation2], %s214
        // Predicated region
        $region33: #{tpu_custom_call.1} parent=31 // pred_check
          %p216 = pneg %p119
        $region34: #{tpu_custom_call.1} parent=31 // pred_check_branch
          %218 = sbr.rel (%p216) target = $region36
        $region35: #{tpu_custom_call.1} parent=31 // pred_region
          %220 = vsyncadd %s212, 0
          %s221 = sadd.s32 %s22, %s21
          %s222 = smul.addr %s221, 8
          %s223 = scalar_lea.hbm %s3, %s222
          %s225 = sshll.u32 %s215, 4
          %s226 = int_to_ptr.vmem [resolvable:$true] %s225
          %s227 = sshll.u32 %s223, 4
          %s228 = int_to_ptr.hbm [resolvable:$true] %s227
          %230 = dma.vmem_to_hbm [thread:$0]  %s226, 128, %s228, %s212
        $region36: #{tpu_custom_call.1} parent=31 // pred_fallthru
          _
      $region32: #{tpu_custom_call.1} parent=5 // pred_fallthru
        _
      %p231 = scmp.le.s32.totalorder 2, %s12
      // Predicated region
      $region37: #{tpu_custom_call.1} parent=5 // pred_check
        %p232 = pneg %p231
      $region38: #{tpu_custom_call.1} parent=5 // pred_check_branch
        %234 = sbr.rel (%p232) target = $region40
      $region39: #{tpu_custom_call.1} parent=5 // pred_region
        %s235 = ssub.s32 %s12, 2
        // Predicated region
        $region41: #{tpu_custom_call.1} parent=39 // pred_check
          %p236 = pneg %p125
        $region42: #{tpu_custom_call.1} parent=39 // pred_check_branch
          %238 = sbr.rel (%p236) target = $region44
        $region43: #{tpu_custom_call.1} parent=39 // pred_region
          %s239 = sand.u32 %s110, 1
          %s240 = scalar_lea.sflag [#allocation3], %s239
          %s241 = sand.u32 %s110, 1
          %s242 = smul.addr %s241, 8
          %s243 = scalar_lea.vmem [#allocation2], %s242
          %245 = dma.done %s240, 128
        $region44: #{tpu_custom_call.1} parent=39 // pred_fallthru
          _
      $region40: #{tpu_custom_call.1} parent=5 // pred_fallthru
        _
    $region6: #{tpu_custom_call.1} parent=1 // loop_footer
      %s16 = sadd.s32 1, %s12
    $region7: #{tpu_custom_call.1} parent=1 // loop_footer_branch
      %11 = sbr.rel target = $region3
    $region8: #{tpu_custom_call.1} parent=1 // loop_exit
      _
    %246 = vsyncpa [#allocation3], 1
    %s247 = scalar_lea.sflag [#allocation3], 1
    %248 = vsyncpa %s247, 1

</llo_original>
